<compile_context>
chip_gen: v7x
topology: tpu7x:2x2x1
jax: 0.10.0
libtpu: 0.0.40
codegen_flags: <defaults>
</compile_context>

<pallas_src>
import jax
import jax.numpy as jnp
from jax.experimental import pallas as pl
from jax.experimental.pallas import tpu as pltpu


def _round_up(x: int, m: int) -> int:
    return ((x + m - 1) // m) * m


def _cdiv(a: int, b: int) -> int:
    return -(-a // b)


# ----------------------------------------------------------------------------
# Kernel
# ----------------------------------------------------------------------------
def _decoder_mlp_kernel(x_ref, w1_ref, b1_ref, w2_ref, b2_ref, o_ref):
    # Cast x to bf16 only at the MXU edge (stored dtype stays f32 in HBM).
    x = x_ref[...].astype(jnp.bfloat16)

    # hidden = relu(x @ W1 + b1): bf16 MXU operands, f32 accumulation,
    # f32 elementwise (v5e VPU/EUP have no bf16).  Bias + ReLU + downcast are
    # fused so the long-lived hidden tile is bf16.
    h = jnp.dot(x, w1_ref[...], preferred_element_type=jnp.float32)
    h = jnp.maximum(h + b1_ref[...], 0.0).astype(jnp.bfloat16)

    # out = sigmoid(h @ W2 + b2): f32 accumulation, f32 sigmoid (EUP).
    z = jnp.dot(h, w2_ref[...], preferred_element_type=jnp.float32)
    o_ref[...] = jax.nn.sigmoid(z + b2_ref[...]).astype(o_ref.dtype)


# ----------------------------------------------------------------------------
# One-time parameter prep (hoisted out of the per-call forward path)
# ----------------------------------------------------------------------------
def prepare_decoder_params(w1, b1, w2, b2):
    """Pad the hidden dim to a lane-dense multiple of 128 and pre-cast the
    matmul weights to bf16, ONCE.  Weight layout is (in, out).  The latent
    dim is left unpadded so output writeback is exactly B*latent*4 bytes."""
    in_f, hidden = w1.shape
    latent = w2.shape[1]
    hid_p = _round_up(hidden, 128)

    b1 = jnp.reshape(b1, (1, hidden))
    b2 = jnp.reshape(b2, (1, latent))

    # Extra hidden units: zero weights + zero bias -> relu(0)=0 -> the padded
    # rows of W2 (also zero) contribute nothing to the second matmul.
    w1_p = jnp.pad(w1, ((0, 0), (0, hid_p - hidden))).astype(jnp.bfloat16)
    b1_p = jnp.pad(b1, ((0, 0), (0, hid_p - hidden))).astype(jnp.float32)
    w2_p = jnp.pad(w2, ((0, hid_p - hidden), (0, 0))).astype(jnp.bfloat16)
    b2_p = b2.astype(jnp.float32)

    return dict(w1=w1_p, b1=b1_p, w2=w2_p, b2=b2_p,
                in_features=in_f, hidden=hidden, hid_p=hid_p, latent=latent)


# ----------------------------------------------------------------------------
# Tile-size / VMEM heuristics
# ----------------------------------------------------------------------------
def _choose_tm(batch, in_f, hid_p, latent, tm_max, vmem_budget_bytes):
    # >= 2 grid steps so the "parallel" axis can shard across both v7x
    # TensorCores; multiple of 16 rows (bf16 packs 16 rows per vreg pair).
    tm = min(tm_max, _round_up(max(_cdiv(batch, 2), 1), 16))

    # Resident weights/biases (assume double-buffered by the pipeline).
    weight_bytes = 2 * ((in_f * hid_p + hid_p * latent) * 2
                        + (hid_p + latent) * 4)
    while tm > 16:
        io_bytes = 2 * tm * in_f * 4 + 2 * tm * latent * 4        # x/out dbl-buf
        live_bytes = tm * hid_p * (4 + 2) + 2 * tm * latent * 4   # h f32+bf16, z
        if weight_bytes + io_bytes + live_bytes <= vmem_budget_bytes:
            break
        tm = _round_up(tm // 2, 16)
    return tm, weight_bytes


# ----------------------------------------------------------------------------
# Forward pass
# ----------------------------------------------------------------------------
def decoder_mlp_apply(x, params, *, tm_max=512,
                      vmem_budget_bytes=14 * 1024 * 1024):
    """x: (B, in_features) float32; params from prepare_decoder_params().
    Returns (B, latent) float32 = sigmoid(relu(x @ W1 + b1) @ W2 + b2)."""
    B, in_f = x.shape
    assert in_f == params["in_features"]
    hid_p, latent, hidden = params["hid_p"], params["latent"], params["hidden"]

    tm, weight_bytes = _choose_tm(B, in_f, hid_p, latent,
                                  tm_max, vmem_budget_bytes)
    n_tiles = _cdiv(B, tm)  # ragged last tile handled by Pallas masking

    # Advisory cost (true FLOPs are tiny; kernel is HBM-bound).
    cost = pl.CostEstimate(
        flops=2 * B * in_f * hidden + 2 * B * hidden * latent,
        transcendentals=B * latent,
        bytes_accessed=(B * in_f * x.dtype.itemsize
                        + (in_f * hid_p + hid_p * latent) * 2
                        + (hid_p + latent) * 4
                        + B * latent * 4))

    vmem_limit = int(min(
        64 << 20,  # v7x physical VMEM per TC
        max(8 << 20,
            weight_bytes
            + 2 * tm * in_f * 4 + 2 * tm * latent * 4
            + tm * hid_p * 8
            + (4 << 20))))
    # TODO(synk): for very large hidden dims on v7x, pipeline_mode=pl.Buffered(1)
    # on the weight BlockSpecs would halve resident-weight VMEM.

    out = pl.pallas_call(
        _decoder_mlp_kernel,
        out_shape=jax.ShapeDtypeStruct((B, latent), jnp.float32),
        grid=(n_tiles,),
        in_specs=[
            pl.BlockSpec((tm, in_f), lambda i: (i, 0)),       # x: row-tiled, f32
            pl.BlockSpec((in_f, hid_p), lambda i: (0, 0)),    # W1: VMEM-resident
            pl.BlockSpec((1, hid_p), lambda i: (0, 0)),       # b1: resident
            pl.BlockSpec((hid_p, latent), lambda i: (0, 0)),  # W2: resident
            pl.BlockSpec((1, latent), lambda i: (0, 0)),      # b2: resident
        ],
        out_specs=pl.BlockSpec((tm, latent), lambda i: (i, 0)),
        compiler_params=pltpu.CompilerParams(
            dimension_semantics=("parallel",),
            vmem_limit_bytes=vmem_limit),
        cost_estimate=cost,
    )(x, params["w1"], params["b1"], params["w2"], params["b2"])
    return out


def reference_mlp(x, w1, b1, w2, b2):
    h = jnp.maximum(x @ w1 + b1, 0.0)
    return jax.nn.sigmoid(h @ w2 + b2)


if __name__ == "__main__":
    # Shapes consistent with the module: in_features=32, hidden_dim=64,
    # latent_dim=16.  batch=200 so the grid has 2 tiles (both v7x TCs busy)
    # and the last tile is ragged (exercises the masked boundary path).
    B, IN, HID, LAT = 200, 32, 64, 16

    key = jax.random.PRNGKey(0)
    kx, k1, k2, k3, k4 = jax.random.split(key, 5)

    x = jax.random.normal(kx, (B, IN), dtype=jnp.float32)

    # Deterministic parameter init (mimicking PyTorch Linear's uniform fan-in
    # scaling); weights pre-transposed to (in, out) for the kernel.
    lim1 = 1.0 / jnp.sqrt(IN)
    w1 = jax.random.uniform(k1, (IN, HID), minval=-lim1, maxval=lim1,
                            dtype=jnp.float32)
    b1 = jax.random.uniform(k2, (1, HID), minval=-lim1, maxval=lim1,
                            dtype=jnp.float32)
    lim2 = 1.0 / jnp.sqrt(HID)
    w2 = jax.random.uniform(k3, (HID, LAT), minval=-lim2, maxval=lim2,
                            dtype=jnp.float32)
    b2 = jax.random.uniform(k4, (1, LAT), minval=-lim2, maxval=lim2,
                            dtype=jnp.float32)

    # One-time parameter prep (would be done once at model load time).
    params = prepare_decoder_params(w1, b1, w2, b2)

    out = decoder_mlp_apply(x, params)
    out = jax.block_until_ready(out)

    ref = reference_mlp(x, w1, b1, w2, b2)
    assert out.shape == (B, LAT)
    # bf16 matmul operands -> relaxed tolerance vs the f32 reference.
    assert jnp.allclose(out, ref, atol=3e-2, rtol=3e-2), "mismatch vs reference"

    print("KERNEL_OK")
</pallas_src>

<mosaic_0001>
module attributes {stable_mosaic.version = 11 : i64} {
  func.func @_decoder_mlp_kernel(%arg0: i32, %arg1: memref<112x32xf32, #tpu.memory_space<vmem>>, %arg2: memref<32x128xbf16, #tpu.memory_space<vmem>>, %arg3: memref<1x128xf32, #tpu.memory_space<vmem>>, %arg4: memref<128x16xbf16, #tpu.memory_space<vmem>>, %arg5: memref<1x16xf32, #tpu.memory_space<vmem>>, %arg6: memref<112x16xf32, #tpu.memory_space<vmem>>) attributes {dimension_semantics = [#tpu.dimension_semantics<parallel>], iteration_bounds = array<i64: 2>, scalar_prefetch = 0 : i64, scratch_operands = 0 : i64, tpu.core_type = #tpu.core_type<tc>, window_params = [{transform_indices = @transform_0, window_bounds = array<i64: 112, 32>}, {pipeline_mode = #tpu.pipeline_mode<synchronous>, transform_indices = @transform_1, window_bounds = array<i64: 32, 128>}, {pipeline_mode = #tpu.pipeline_mode<synchronous>, transform_indices = @transform_2, window_bounds = array<i64: 1, 128>}, {pipeline_mode = #tpu.pipeline_mode<synchronous>, transform_indices = @transform_3, window_bounds = array<i64: 128, 16>}, {pipeline_mode = #tpu.pipeline_mode<synchronous>, transform_indices = @transform_4, window_bounds = array<i64: 1, 16>}, {transform_indices = @transform_5, window_bounds = array<i64: 112, 16>}]} {
    %c0 = arith.constant 0 : index
    %c0_0 = arith.constant 0 : index
    %0 = vector.load %arg1[%c0, %c0_0] : memref<112x32xf32, #tpu.memory_space<vmem>>, vector<112x32xf32>
    %1 = arith.truncf %0 : vector<112x32xf32> to vector<112x32xbf16>
    %c0_1 = arith.constant 0 : index
    %c0_2 = arith.constant 0 : index
    %2 = vector.load %arg2[%c0_1, %c0_2] : memref<32x128xbf16, #tpu.memory_space<vmem>>, vector<32x128xbf16>
    %cst = arith.constant dense<0.000000e+00> : vector<112x128xf32>
    %3 = tpu.matmul %1, %2, %cst {dimension_numbers = #tpu.dot_dimension_numbers<[1], [0], [0], [1], [0, 0, 1, 1], [], []>} : vector<112x32xbf16>, vector<32x128xbf16>, vector<112x128xf32> -> vector<112x128xf32>
    %c0_3 = arith.constant 0 : index
    %c0_4 = arith.constant 0 : index
    %4 = vector.load %arg3[%c0_3, %c0_4] : memref<1x128xf32, #tpu.memory_space<vmem>>, vector<1x128xf32>
    %5 = vector.broadcast %4 : vector<1x128xf32> to vector<112x128xf32>
    %6 = arith.addf %3, %5 : vector<112x128xf32>
    %cst_5 = arith.constant 0.000000e+00 : f32
    %7 = vector.broadcast %cst_5 : f32 to vector<112x128xf32>
    %8 = arith.maximumf %6, %7 : vector<112x128xf32>
    %9 = arith.truncf %8 : vector<112x128xf32> to vector<112x128xbf16>
    %c0_6 = arith.constant 0 : index
    %c0_7 = arith.constant 0 : index
    %10 = vector.load %arg4[%c0_6, %c0_7] : memref<128x16xbf16, #tpu.memory_space<vmem>>, vector<128x16xbf16>
    %cst_8 = arith.constant dense<0.000000e+00> : vector<112x16xf32>
    %11 = tpu.matmul %9, %10, %cst_8 {dimension_numbers = #tpu.dot_dimension_numbers<[1], [0], [0], [1], [0, 0, 1, 1], [], []>} : vector<112x128xbf16>, vector<128x16xbf16>, vector<112x16xf32> -> vector<112x16xf32>
    %c0_9 = arith.constant 0 : index
    %c0_10 = arith.constant 0 : index
    %12 = vector.load %arg5[%c0_9, %c0_10] : memref<1x16xf32, #tpu.memory_space<vmem>>, vector<1x16xf32>
    %13 = vector.broadcast %12 : vector<1x16xf32> to vector<112x16xf32>
    %14 = arith.addf %11, %13 : vector<112x16xf32>
    %15 = arith.negf %14 : vector<112x16xf32>
    %16 = math.exp %15 : vector<112x16xf32>
    %cst_11 = arith.constant 1.000000e+00 : f32
    %17 = vector.broadcast %cst_11 : f32 to vector<112x16xf32>
    %18 = arith.addf %17, %16 : vector<112x16xf32>
    %19 = arith.divf %17, %18 : vector<112x16xf32>
    %c0_12 = arith.constant 0 : index
    %c0_13 = arith.constant 0 : index
    %20 = vector.load %arg6[%c0_12, %c0_13] : memref<112x16xf32, #tpu.memory_space<vmem>>, vector<112x16xf32>
    tpu.vector_store %arg6[%c0_12, %c0_13], %19 {strides = array<i32>} : memref<112x16xf32, #tpu.memory_space<vmem>>, vector<112x16xf32>,
    return
  }
  func.func @transform_0(%arg0: i32) -> (i32, i32) {
    %c0_i32 = arith.constant 0 : i32
    %c0_i32_0 = arith.constant 0 : i32
    return %arg0, %c0_i32 : i32, i32
  }
  func.func @transform_1(%arg0: i32) -> (i32, i32) {
    %c0_i32 = arith.constant 0 : i32
    %c0_i32_0 = arith.constant 0 : i32
    %c0_i32_1 = arith.constant 0 : i32
    return %c0_i32, %c0_i32_0 : i32, i32
  }
  func.func @transform_2(%arg0: i32) -> (i32, i32) {
    %c0_i32 = arith.constant 0 : i32
    %c0_i32_0 = arith.constant 0 : i32
    %c0_i32_1 = arith.constant 0 : i32
    return %c0_i32, %c0_i32_0 : i32, i32
  }
  func.func @transform_3(%arg0: i32) -> (i32, i32) {
    %c0_i32 = arith.constant 0 : i32
    %c0_i32_0 = arith.constant 0 : i32
    %c0_i32_1 = arith.constant 0 : i32
    return %c0_i32, %c0_i32_0 : i32, i32
  }
  func.func @transform_4(%arg0: i32) -> (i32, i32) {
    %c0_i32 = arith.constant 0 : i32
    %c0_i32_0 = arith.constant 0 : i32
    %c0_i32_1 = arith.constant 0 : i32
    return %c0_i32, %c0_i32_0 : i32, i32
  }
  func.func @transform_5(%arg0: i32) -> (i32, i32) {
    %c0_i32 = arith.constant 0 : i32
    %c0_i32_0 = arith.constant 0 : i32
    return %arg0, %c0_i32 : i32, i32
  }
}

</mosaic_0001>

<llo_original>
// kernel: tpu_custom_call.1
$region0: #{tpu_custom_call.1}
  #allocation0 [shape = 'u32[]', space=smem, size = 0x4, offset = 0x4, fixed_abs, tag = 'smem constant byte address 0x4 - core index']
  #allocation1 [shape = 'u32[144,128]{1,0:T(1,128)}', space=vmem, size = 0x12000, scoped, tag = 'internal scratch']
  %s0 = inlined_call_operand.vmem [shape: f32[200,32], index: 0, kind: input, shape index: {}]
  %s1 = inlined_call_operand.vmem [shape: bf16[32,128], index: 1, kind: input, shape index: {}]
  %s2 = inlined_call_operand.vmem [shape: f32[1,128], index: 2, kind: input, shape index: {}]
  %s3 = inlined_call_operand.vmem [shape: bf16[128,16], index: 3, kind: input, shape index: {}]
  %s4 = inlined_call_operand.vmem [shape: f32[1,16], index: 4, kind: input, shape index: {}]
  %s5 = inlined_call_operand.vmem [shape: f32[200,16], index: 5, kind: output, shape index: {}]
  %s6 = sld [smem:[#allocation0]]
  $region101: #{tpu_custom_call.1} parent=0
    _
  %s8 = ssub.s32 1, %s6
  %s9 = scalar_select 0, %s8, %s6
  $region1: #{tpu_custom_call.1} parent=0
    #allocation2 [shape = 'u8[114688]{0}', space=vmem, size = 0x1c000, scoped, tag = 'output window, operand 0']
    loop: start=0, step=1, limit=4
    $region2: #{tpu_custom_call.1} parent=1 // loop_pre_header
      _
    $region3: #{tpu_custom_call.1} parent=1 // loop_header
      %s11 = sphi 0, %s15
      %p12 = scmp.ge.s32.totalorder %s11, 4
      %s21 = sphi 0, %s23
      %s24 = sphi 0, %s21
      %s25 = sphi 0, %s24
      %s41 = sphi 0, %s25
      %s45 = sphi 0, %s45
      %s47 = sphi 0, %s45
      %s48 = sphi 0, %s47
      %s62 = sphi 0, %s48
      %s66 = sphi 0, %s66
      %s68 = sphi 0, %s66
      %s69 = sphi 0, %s68
      %s83 = sphi 0, %s69
      %s87 = sphi 0, %s87
      %s89 = sphi 0, %s87
      %s90 = sphi 0, %s89
      %s104 = sphi 0, %s90
      %s108 = sphi 0, %s108
      %s110 = sphi 0, %s108
      %s111 = sphi 0, %s110
      %s125 = sphi 0, %s111
      %s131 = sphi 0, %s133
      %s134 = sphi 0, %s131
      %s135 = sphi 0, %s134
      %s151 = sphi 0, %s135
    $region4: #{tpu_custom_call.1} parent=1 // loop_header_branch
      %14 = sbr.rel (%p12) target = $region8
    $region5: #{tpu_custom_call.1} parent=1 // loop_body
      %s16 = ssub.s32 %s11, 1
      %s17 = ssub.s32 %s11, 2
      %s18 = sadd.s32 %s11, 1
      %s19 = ssub.s32 %s11, %s18
      %p20 = scmp.eq.s32.totalorder %s19, 0
      %s22 = sadd.s32 %s21, 1
      %s23 = scalar_select %p20, %s21, %s22
      %p26 = pneg %p20
      %p27 = scmp.eq.s32.totalorder %s11, 1
      %p28 = por %p26, %p27
      %p29 = scmp.ne.s32.totalorder %s21, %s24
      %p30 = scmp.eq.s32.totalorder %s11, 0
      %p31 = por %p29, %p30
      %p32 = scmp.ne.s32.totalorder %s21, %s24
      %p33 = scmp.eq.s32.totalorder %s16, 1
      %p34 = por %p32, %p33
      %p35 = scmp.ne.s32.totalorder %s24, %s25
      %p36 = scmp.eq.s32.totalorder %s16, 0
      %p37 = por %p35, %p36
      %p38 = scmp.ne.s32.totalorder %s24, %s25
      %p39 = scmp.eq.s32.totalorder %s17, 1
      %p40 = por %p38, %p39
      %p42 = scmp.ne.s32.totalorder %s25, %s41
      %p43 = scmp.eq.s32.totalorder %s17, 0
      %p44 = por %p42, %p43
      %s46 = sadd.s32 %s45, 1
      %p49 = scmp.eq.s32.totalorder %s11, 1
      %p50 = scmp.ne.s32.totalorder %s45, %s47
      %p51 = scmp.eq.s32.totalorder %s11, 0
      %p52 = por %p50, %p51
      %p53 = scmp.ne.s32.totalorder %s45, %s47
      %p54 = scmp.eq.s32.totalorder %s16, 1
      %p55 = por %p53, %p54
      %p56 = scmp.ne.s32.totalorder %s47, %s48
      %p57 = scmp.eq.s32.totalorder %s16, 0
      %p58 = por %p56, %p57
      %p59 = scmp.ne.s32.totalorder %s47, %s48
      %p60 = scmp.eq.s32.totalorder %s17, 1
      %p61 = por %p59, %p60
      %p63 = scmp.ne.s32.totalorder %s48, %s62
      %p64 = scmp.eq.s32.totalorder %s17, 0
      %p65 = por %p63, %p64
      %s67 = sadd.s32 %s66, 1
      %p70 = scmp.eq.s32.totalorder %s11, 1
      %p71 = scmp.ne.s32.totalorder %s66, %s68
      %p72 = scmp.eq.s32.totalorder %s11, 0
      %p73 = por %p71, %p72
      %p74 = scmp.ne.s32.totalorder %s66, %s68
      %p75 = scmp.eq.s32.totalorder %s16, 1
      %p76 = por %p74, %p75
      %p77 = scmp.ne.s32.totalorder %s68, %s69
      %p78 = scmp.eq.s32.totalorder %s16, 0
      %p79 = por %p77, %p78
      %p80 = scmp.ne.s32.totalorder %s68, %s69
      %p81 = scmp.eq.s32.totalorder %s17, 1
      %p82 = por %p80, %p81
      %p84 = scmp.ne.s32.totalorder %s69, %s83
      %p85 = scmp.eq.s32.totalorder %s17, 0
      %p86 = por %p84, %p85
      %s88 = sadd.s32 %s87, 1
      %p91 = scmp.eq.s32.totalorder %s11, 1
      %p92 = scmp.ne.s32.totalorder %s87, %s89
      %p93 = scmp.eq.s32.totalorder %s11, 0
      %p94 = por %p92, %p93
      %p95 = scmp.ne.s32.totalorder %s87, %s89
      %p96 = scmp.eq.s32.totalorder %s16, 1
      %p97 = por %p95, %p96
      %p98 = scmp.ne.s32.totalorder %s89, %s90
      %p99 = scmp.eq.s32.totalorder %s16, 0
      %p100 = por %p98, %p99
      %p101 = scmp.ne.s32.totalorder %s89, %s90
      %p102 = scmp.eq.s32.totalorder %s17, 1
      %p103 = por %p101, %p102
      %p105 = scmp.ne.s32.totalorder %s90, %s104
      %p106 = scmp.eq.s32.totalorder %s17, 0
      %p107 = por %p105, %p106
      %s109 = sadd.s32 %s108, 1
      %p112 = scmp.eq.s32.totalorder %s11, 1
      %p113 = scmp.ne.s32.totalorder %s108, %s110
      %p114 = scmp.eq.s32.totalorder %s11, 0
      %p115 = por %p113, %p114
      %p116 = scmp.ne.s32.totalorder %s108, %s110
      %p117 = scmp.eq.s32.totalorder %s16, 1
      %p118 = por %p116, %p117
      %p119 = scmp.ne.s32.totalorder %s110, %s111
      %p120 = scmp.eq.s32.totalorder %s16, 0
      %p121 = por %p119, %p120
      %p122 = scmp.ne.s32.totalorder %s110, %s111
      %p123 = scmp.eq.s32.totalorder %s17, 1
      %p124 = por %p122, %p123
      %p126 = scmp.ne.s32.totalorder %s111, %s125
      %p127 = scmp.eq.s32.totalorder %s17, 0
      %p128 = por %p126, %p127
      %s129 = ssub.s32 %s11, %s18
      %p130 = scmp.eq.s32.totalorder %s129, 0
      %s132 = sadd.s32 %s131, 1
      %s133 = scalar_select %p130, %s131, %s132
      %p136 = pneg %p130
      %p137 = scmp.eq.s32.totalorder %s11, 1
      %p138 = por %p136, %p137
      %p139 = scmp.ne.s32.totalorder %s131, %s134
      %p140 = scmp.eq.s32.totalorder %s11, 0
      %p141 = por %p139, %p140
      %p142 = scmp.ne.s32.totalorder %s131, %s134
      %p143 = scmp.eq.s32.totalorder %s16, 1
      %p144 = por %p142, %p143
      %p145 = scmp.ne.s32.totalorder %s134, %s135
      %p146 = scmp.eq.s32.totalorder %s16, 0
      %p147 = por %p145, %p146
      %p148 = scmp.ne.s32.totalorder %s134, %s135
      %p149 = scmp.eq.s32.totalorder %s17, 1
      %p150 = por %p148, %p149
      %p152 = scmp.ne.s32.totalorder %s135, %s151
      %p153 = scmp.eq.s32.totalorder %s17, 0
      %p154 = por %p152, %p153
      %p155 = scmp.le.s32.totalorder 1, %s11
      %p156 = scmp.lt.s32.totalorder %s11, 3
      %p157 = pnand %p155, %p156
      %p158 = pneg %p157
      // Predicated region
      $region9: #{tpu_custom_call.1} parent=5 // pred_check
        _
      $region10: #{tpu_custom_call.1} parent=5 // pred_check_branch
        %160 = sbr.rel (%p157) target = $region12
      $region11: #{tpu_custom_call.1} parent=5 // pred_region
        %s161 = ssub.s32 %s11, 1
        // Predicated region
        $region13: #{tpu_custom_call.1} parent=11 // pred_check
          %p162 = pneg %p58
        $region14: #{tpu_custom_call.1} parent=11 // pred_check_branch
          %164 = sbr.rel (%p162) target = $region16
        $region15: #{tpu_custom_call.1} parent=11 // pred_region
          _
        $region16: #{tpu_custom_call.1} parent=11 // pred_fallthru
          _
        // Predicated region
        $region17: #{tpu_custom_call.1} parent=11 // pred_check
          %p165 = pneg %p79
        $region18: #{tpu_custom_call.1} parent=11 // pred_check_branch
          %167 = sbr.rel (%p165) target = $region20
        $region19: #{tpu_custom_call.1} parent=11 // pred_region
          _
        $region20: #{tpu_custom_call.1} parent=11 // pred_fallthru
          _
        // Predicated region
        $region21: #{tpu_custom_call.1} parent=11 // pred_check
          %p168 = pneg %p100
        $region22: #{tpu_custom_call.1} parent=11 // pred_check_branch
          %170 = sbr.rel (%p168) target = $region24
        $region23: #{tpu_custom_call.1} parent=11 // pred_region
          _
        $region24: #{tpu_custom_call.1} parent=11 // pred_fallthru
          _
        // Predicated region
        $region25: #{tpu_custom_call.1} parent=11 // pred_check
          %p171 = pneg %p121
        $region26: #{tpu_custom_call.1} parent=11 // pred_check_branch
          %173 = sbr.rel (%p171) target = $region28
        $region27: #{tpu_custom_call.1} parent=11 // pred_region
          _
        $region28: #{tpu_custom_call.1} parent=11 // pred_fallthru
          _
      $region12: #{tpu_custom_call.1} parent=5 // pred_fallthru
        _
      %p174 = scmp.lt.s32.totalorder %s11, 2
      // Predicated region
      $region29: #{tpu_custom_call.1} parent=5 // pred_check
        %p175 = pneg %p174
      $region30: #{tpu_custom_call.1} parent=5 // pred_check_branch
        %177 = sbr.rel (%p175) target = $region32
      $region31: #{tpu_custom_call.1} parent=5 // pred_region
        // Predicated region
        $region33: #{tpu_custom_call.1} parent=31 // pred_check
          %p178 = pneg %p31
        $region34: #{tpu_custom_call.1} parent=31 // pred_check_branch
          %180 = sbr.rel (%p178) target = $region36
        $region35: #{tpu_custom_call.1} parent=31 // pred_region
          %s181 = smul.u32 14, %s11
          %s182 = ssub.s32 25, %s181
          %p183 = scmp.lt.s32.totalorder %s182, 14
          %s184 = scalar_select %p183, %s182, 14
          %s185 = smul.u32 128, %s184
          %p186 = scmp.lt.s32.totalorder %s181, 24
          %s187 = scalar_select %p186, %s181, 24
          %s188 = smul.addr %s187, 8
          %s189 = scalar_lea.vmem %s0, %s188
          %s190 = smul.u32 14, %s11
          %s191 = ssub.s32 25, %s190
          %p192 = scmp.lt.s32.totalorder %s191, 14
          %s193 = scalar_select %p192, %s191, 14
          %s194 = smul.u32 128, %s193
        $region36: #{tpu_custom_call.1} parent=31 // pred_fallthru
          _
      $region32: #{tpu_custom_call.1} parent=5 // pred_fallthru
        _
      %p195 = scmp.le.s32.totalorder 1, %s11
      %p196 = scmp.lt.s32.totalorder %s11, 3
      %p197 = pnand %p195, %p196
      %p198 = pneg %p197
      // Predicated region
      $region37: #{tpu_custom_call.1} parent=5 // pred_check
        _
      $region38: #{tpu_custom_call.1} parent=5 // pred_check_branch
        %200 = sbr.rel (%p197) target = $region40
      $region39: #{tpu_custom_call.1} parent=5 // pred_region
        %s201 = ssub.s32 %s11, 1
        %s202 = smul.u32 14, %s16
        %s203 = ssub.s32 25, %s202
        %p204 = scmp.lt.s32.totalorder %s203, 14
        %s205 = scalar_select %p204, %s203, 14
        %s206 = smul.u32 128, %s205
        %p207 = scmp.lt.s32.totalorder %s202, 24
        %s208 = scalar_select %p207, %s202, 24
        %s209 = smul.addr %s208, 8
        %s210 = scalar_lea.vmem %s0, %s209
        %p211 = pneg %p37
        %p212 = pneg %p34
        %p213 = pneg %p58
        %p214 = pneg %p55
        %p215 = pneg %p79
        %p216 = pneg %p76
        %p217 = pneg %p100
        %p218 = pneg %p97
        %p219 = pneg %p121
        %p220 = pneg %p118
        %p221 = pneg %p147
        %p222 = pneg %p144
        %s223 = sand.u32 %s134, 1
        %s224 = sand.u32 %s134, 1
        %s225 = smul.addr %s224, 112
        %s226 = scalar_lea.vmem [#allocation2], %s225
        %s227 = smul.u32 14, %s16
        %s228 = ssub.s32 25, %s227
        %p229 = scmp.lt.s32.totalorder %s228, 14
        %s230 = scalar_select %p229, %s228, 14
        %s231 = smul.u32 128, %s230
        %p232 = scmp.lt.s32.totalorder %s227, 24
        %s233 = scalar_select %p232, %s227, 24
        %s234 = smul.addr %s233, 8
        %s235 = scalar_lea.vmem %s0, %s234
        %s236 = smul.u32 14, %s16
        %s237 = ssub.s32 25, %s236
        %p238 = scmp.lt.s32.totalorder %s237, 14
        %s239 = scalar_select %p238, %s237, 14
        %s240 = smul.u32 128, %s239
        %s241 = smul.u32 14, %s16
        %s242 = ssub.s32 25, %s241
        %p243 = scmp.lt.s32.totalorder %s242, 14
        %s244 = scalar_select %p243, %s242, 14
        %s245 = smul.u32 128, %s244
        %v247 = vld [vmem:[%s235] sm:$0xff]
        %v248 = vld [vmem:[%s235 + $0x8] sm:$0xff]
        %v249 = vld [vmem:[%s235 + $0x10] sm:$0xff]
        %v250 = vld [vmem:[%s235 + $0x18] sm:$0xff]
        %v251 = vld [vmem:[%s235 + $0x20] sm:$0xff]
        %v252 = vld [vmem:[%s235 + $0x28] sm:$0xff]
        %v253 = vld [vmem:[%s235 + $0x30] sm:$0xff]
        %v254 = vld [vmem:[%s235 + $0x38] sm:$0xff]
        %v255 = vld [vmem:[%s235 + $0x40] sm:$0xff]
        %v256 = vld [vmem:[%s235 + $0x48] sm:$0xff]
        %v257 = vld [vmem:[%s235 + $0x50] sm:$0xff]
        %v258 = vld [vmem:[%s235 + $0x58] sm:$0xff]
        %v259 = vld [vmem:[%s235 + $0x60] sm:$0xff]
        %v260 = vld [vmem:[%s235 + $0x68] sm:$0xff]
        %v261 = vpack.c.bf16 %v248, %v247
        %v262 = vpack.c.bf16 %v250, %v249
        %v263 = vpack.c.bf16 %v252, %v251
        %v264 = vpack.c.bf16 %v254, %v253
        %v265 = vpack.c.bf16 %v256, %v255
        %v266 = vpack.c.bf16 %v258, %v257
        %v267 = vpack.c.bf16 %v260, %v259
        %v268 = vld [vmem:[%s1] sm:$0xf]
        %v269 = vld [vmem:[%s1 + $0x4] sm:$0xf]
        %v270 = vld [vmem:[%s1 + $0x8] sm:$0xf]
        %v271 = vld [vmem:[%s1 + $0xc] sm:$0xf]
        %v272 = vld [vmem:[%s2] sm:$0x1]
        %v274 = vlaneseq
        %v275 = vshrl.u32 %v274, 7
        %v276 = vsub.s32 0, %v275
        %v277 = vrot.slane %v272, %v276
        %v283 = vunpack.c.l.b16 %v268
        %v284 = vunpack.c.l.b16 %v269
        %v285 = vunpack.c.l.b16 %v270
        %v286 = vunpack.c.l.b16 %v271
        %v287 = vpack.c.b16 %v284, %v283
        %v288 = vpack.c.b16 %v286, %v285
        %vm291 = vcmask 261120
        %v293 = vsel %vm291, %v261, 0
        %v296 = vsel %vm291, %v262, 0
        %v299 = vsel %vm291, %v263, 0
        %v302 = vsel %vm291, %v264, 0
        %v305 = vsel %vm291, %v265, 0
        %v308 = vsel %vm291, %v266, 0
        %v311 = vsel %vm291, %v267, 0
        %313 = vmatprep.subr.bf16.mxu0 0
        %314 = vmatpush1.bf16.msra.mxu0 %v287
        %315 = vmatprep.subr.bf16.mxu0 0
        %316 = vmatpush1.bf16.msra.mxu0 %v288
        %317 = vmatprep.subr.bf16.mxu0 0
        %318 = vmatpush1.bf16.msra.mxu0 0
        %319 = vmatprep.subr.bf16.mxu0 0
        %320 = vmatpush1.bf16.msra.mxu0 0
        %321 = vmatprep.subr.bf16.mxu0 0
        %322 = vmatpush1.bf16.msra.mxu0 0
        %323 = vmatprep.subr.bf16.mxu0 0
        %324 = vmatpush1.bf16.msra.mxu0 0
        %325 = vmatprep.subr.bf16.mxu0 0
        %326 = vmatpush1.bf16.msra.mxu0 0
        %327 = vmatprep.subr.bf16.mxu0 0
        %328 = vmatpush1.bf16.msra.mxu0 0
        %329 = vmatprep.subr.bf16.mxu0 0
        %330 = vmatpush1.bf16.msra.mxu0 0
        %331 = vmatprep.subr.bf16.mxu0 0
        %332 = vmatpush1.bf16.msra.mxu0 0
        %333 = vmatprep.subr.bf16.mxu0 0
        %334 = vmatpush1.bf16.msra.mxu0 0
        %335 = vmatprep.subr.bf16.mxu0 0
        %336 = vmatpush1.bf16.msra.mxu0 0
        %337 = vmatprep.subr.bf16.mxu0 0
        %338 = vmatpush1.bf16.msra.mxu0 0
        %339 = vmatprep.subr.bf16.mxu0 0
        %340 = vmatpush1.bf16.msra.mxu0 0
        %341 = vmatprep.subr.bf16.mxu0 0
        %342 = vmatpush1.bf16.msra.mxu0 0
        %343 = vmatprep.subr.bf16.mxu0 0
        %344 = vmatpush1.bf16.msra.mxu0 0
        %345 = vmatprep.mubr.bf16.mxu0 0
        %346 = vmatmul.mubr.bf16.gmra.mrb[0].mxu0 %v293
        %v347 = vpop.f32.mrb[0].mxu0
        %v348 = vadd.f32 %v277, %v347
        %v349 = vpop.f32.mrb[0].mxu0
        %v350 = vpop.f32.mrb[0].mxu0
        %v351 = vadd.f32 %v277, %v350
        %v352 = vpop.f32.mrb[0].mxu0
        %353 = vmatprep.mubr.bf16.mxu0 0
        %354 = vmatmul.mubr.bf16.gmra.mrb[0].mxu0 %v296
        %v355 = vpop.f32.mrb[0].mxu0
        %v356 = vadd.f32 %v277, %v355
        %v357 = vpop.f32.mrb[0].mxu0
        %v358 = vpop.f32.mrb[0].mxu0
        %v359 = vadd.f32 %v277, %v358
        %v360 = vpop.f32.mrb[0].mxu0
        %361 = vmatprep.mubr.bf16.mxu0 0
        %362 = vmatmul.mubr.bf16.gmra.mrb[0].mxu0 %v299
        %v363 = vpop.f32.mrb[0].mxu0
        %v364 = vadd.f32 %v277, %v363
        %v365 = vpop.f32.mrb[0].mxu0
        %v366 = vpop.f32.mrb[0].mxu0
        %v367 = vadd.f32 %v277, %v366
        %v368 = vpop.f32.mrb[0].mxu0
        %369 = vmatprep.mubr.bf16.mxu0 0
        %370 = vmatmul.mubr.bf16.gmra.mrb[0].mxu0 %v302
        %v371 = vpop.f32.mrb[0].mxu0
        %v372 = vadd.f32 %v277, %v371
        %v373 = vpop.f32.mrb[0].mxu0
        %v374 = vpop.f32.mrb[0].mxu0
        %v375 = vadd.f32 %v277, %v374
        %v376 = vpop.f32.mrb[0].mxu0
        %377 = vmatprep.mubr.bf16.mxu0 0
        %378 = vmatmul.mubr.bf16.gmra.mrb[0].mxu0 %v305
        %v379 = vpop.f32.mrb[0].mxu0
        %v380 = vadd.f32 %v277, %v379
        %v381 = vpop.f32.mrb[0].mxu0
        %v382 = vpop.f32.mrb[0].mxu0
        %v383 = vadd.f32 %v277, %v382
        %v384 = vpop.f32.mrb[0].mxu0
        %385 = vmatprep.mubr.bf16.mxu0 0
        %386 = vmatmul.mubr.bf16.gmra.mrb[0].mxu0 %v308
        %v387 = vpop.f32.mrb[0].mxu0
        %v388 = vadd.f32 %v277, %v387
        %v389 = vpop.f32.mrb[0].mxu0
        %v390 = vpop.f32.mrb[0].mxu0
        %v391 = vadd.f32 %v277, %v390
        %v392 = vpop.f32.mrb[0].mxu0
        %393 = vmatprep.mubr.bf16.mxu0 0
        %394 = vmatmul.mubr.bf16.gmra.mrb[0].mxu0 %v311
        %v395 = vpop.f32.mrb[0].mxu0
        %v396 = vadd.f32 %v277, %v395
        %v397 = vpop.f32.mrb[0].mxu0
        %v398 = vpop.f32.mrb[0].mxu0
        %v399 = vadd.f32 %v277, %v398
        %v400 = vpop.f32.mrb[0].mxu0
        %401 = vdwg.mxu0
        %v402 = vmax.f32 %v348, 0.0
        %v403 = vmax.f32 %v351, 0.0
        %v404 = vmax.f32 %v356, 0.0
        %v405 = vmax.f32 %v359, 0.0
        %v406 = vmax.f32 %v364, 0.0
        %v407 = vmax.f32 %v367, 0.0
        %v408 = vmax.f32 %v372, 0.0
        %v409 = vmax.f32 %v375, 0.0
        %v410 = vmax.f32 %v380, 0.0
        %v411 = vmax.f32 %v383, 0.0
        %v412 = vmax.f32 %v388, 0.0
        %v413 = vmax.f32 %v391, 0.0
        %v414 = vmax.f32 %v396, 0.0
        %v415 = vmax.f32 %v399, 0.0
        %v416 = vpack.c.bf16 %v403, %v402
        %v417 = vpack.c.bf16 %v405, %v404
        %v418 = vpack.c.bf16 %v407, %v406
        %v419 = vpack.c.bf16 %v409, %v408
        %v420 = vpack.c.bf16 %v411, %v410
        %v421 = vpack.c.bf16 %v413, %v412
        %v422 = vpack.c.bf16 %v415, %v414
        %v423 = vld [vmem:[%s3] sm:$0xf]
        %v424 = vld [vmem:[%s3 + $0x4] sm:$0xf]
        %v425 = vld [vmem:[%s3 + $0x8] sm:$0xf]
        %v426 = vld [vmem:[%s3 + $0xc] sm:$0xf]
        %v427 = vld [vmem:[%s3 + $0x10] sm:$0xf]
        %v428 = vld [vmem:[%s3 + $0x14] sm:$0xf]
        %v429 = vld [vmem:[%s3 + $0x18] sm:$0xf]
        %v430 = vld [vmem:[%s3 + $0x1c] sm:$0xf]
        %v431 = vld [vmem:[%s3 + $0x20] sm:$0xf]
        %v432 = vld [vmem:[%s3 + $0x24] sm:$0xf]
        %v433 = vld [vmem:[%s3 + $0x28] sm:$0xf]
        %v434 = vld [vmem:[%s3 + $0x2c] sm:$0xf]
        %v435 = vld [vmem:[%s3 + $0x30] sm:$0xf]
        %v436 = vld [vmem:[%s3 + $0x34] sm:$0xf]
        %v437 = vld [vmem:[%s3 + $0x38] sm:$0xf]
        %v438 = vld [vmem:[%s3 + $0x3c] sm:$0xf]
        %v439 = vld [vmem:[%s4] sm:$0x1]
        %v441 = vlaneseq
        %v442 = vshrl.u32 %v441, 7
        %v443 = vsub.s32 0, %v442
        %v444 = vrot.slane %v439, %v443
        %v462 = vunpack.c.l.b16 %v423
        %v463 = vunpack.c.l.b16 %v424
        %v464 = vunpack.c.l.b16 %v425
        %v465 = vunpack.c.l.b16 %v426
        %v466 = vunpack.c.l.b16 %v427
        %v467 = vunpack.c.l.b16 %v428
        %v468 = vunpack.c.l.b16 %v429
        %v469 = vunpack.c.l.b16 %v430
        %v470 = vunpack.c.l.b16 %v431
        %v471 = vunpack.c.l.b16 %v432
        %v472 = vunpack.c.l.b16 %v433
        %v473 = vunpack.c.l.b16 %v434
        %v474 = vunpack.c.l.b16 %v435
        %v475 = vunpack.c.l.b16 %v436
        %v476 = vunpack.c.l.b16 %v437
        %v477 = vunpack.c.l.b16 %v438
        %v478 = vpack.c.b16 %v463, %v462
        %v479 = vpack.c.b16 %v465, %v464
        %v480 = vpack.c.b16 %v467, %v466
        %v481 = vpack.c.b16 %v469, %v468
        %v482 = vpack.c.b16 %v471, %v470
        %v483 = vpack.c.b16 %v473, %v472
        %v484 = vpack.c.b16 %v475, %v474
        %v485 = vpack.c.b16 %v477, %v476
        %494 = vmatprep.subr.bf16.mxu0 0
        %495 = vmatpush1.bf16.msra.mxu0 %v478
        %496 = vmatprep.subr.bf16.mxu0 0
        %497 = vmatpush1.bf16.msra.mxu0 %v479
        %498 = vmatprep.subr.bf16.mxu0 0
        %499 = vmatpush1.bf16.msra.mxu0 %v480
        %500 = vmatprep.subr.bf16.mxu0 0
        %501 = vmatpush1.bf16.msra.mxu0 %v481
        %502 = vmatprep.subr.bf16.mxu0 0
        %503 = vmatpush1.bf16.msra.mxu0 %v482
        %504 = vmatprep.subr.bf16.mxu0 0
        %505 = vmatpush1.bf16.msra.mxu0 %v483
        %506 = vmatprep.subr.bf16.mxu0 0
        %507 = vmatpush1.bf16.msra.mxu0 %v484
        %508 = vmatprep.subr.bf16.mxu0 0
        %509 = vmatpush1.bf16.msra.mxu0 %v485
        %510 = vmatprep.subr.bf16.mxu0 0
        %511 = vmatpush1.bf16.msra.mxu0 0
        %512 = vmatprep.subr.bf16.mxu0 0
        %513 = vmatpush1.bf16.msra.mxu0 0
        %514 = vmatprep.subr.bf16.mxu0 0
        %515 = vmatpush1.bf16.msra.mxu0 0
        %516 = vmatprep.subr.bf16.mxu0 0
        %517 = vmatpush1.bf16.msra.mxu0 0
        %518 = vmatprep.subr.bf16.mxu0 0
        %519 = vmatpush1.bf16.msra.mxu0 0
        %520 = vmatprep.subr.bf16.mxu0 0
        %521 = vmatpush1.bf16.msra.mxu0 0
        %522 = vmatprep.subr.bf16.mxu0 0
        %523 = vmatpush1.bf16.msra.mxu0 0
        %524 = vmatprep.subr.bf16.mxu0 0
        %525 = vmatpush1.bf16.msra.mxu0 0
        %526 = vmatprep.mubr.bf16.mxu0 0
        %527 = vmatmul.mubr.bf16.gmra.mrb[0].mxu0 %v416
        %v528 = vpop.f32.mrb[0].mxu0
        %v529 = vadd.f32 %v444, %v528
        %v530 = vpop.f32.mrb[0].mxu0
        %v531 = vpop.f32.mrb[0].mxu0
        %v532 = vadd.f32 %v444, %v531
        %v533 = vpop.f32.mrb[0].mxu0
        %534 = vmatprep.mubr.bf16.mxu0 0
        %535 = vmatmul.mubr.bf16.gmra.mrb[0].mxu0 %v417
        %v536 = vpop.f32.mrb[0].mxu0
        %v537 = vadd.f32 %v444, %v536
        %v538 = vpop.f32.mrb[0].mxu0
        %v539 = vpop.f32.mrb[0].mxu0
        %v540 = vadd.f32 %v444, %v539
        %v541 = vpop.f32.mrb[0].mxu0
        %542 = vmatprep.mubr.bf16.mxu0 0
        %543 = vmatmul.mubr.bf16.gmra.mrb[0].mxu0 %v418
        %v544 = vpop.f32.mrb[0].mxu0
        %v545 = vadd.f32 %v444, %v544
        %v546 = vpop.f32.mrb[0].mxu0
        %v547 = vpop.f32.mrb[0].mxu0
        %v548 = vadd.f32 %v444, %v547
        %v549 = vpop.f32.mrb[0].mxu0
        %550 = vmatprep.mubr.bf16.mxu0 0
        %551 = vmatmul.mubr.bf16.gmra.mrb[0].mxu0 %v419
        %v552 = vpop.f32.mrb[0].mxu0
        %v553 = vadd.f32 %v444, %v552
        %v554 = vpop.f32.mrb[0].mxu0
        %v555 = vpop.f32.mrb[0].mxu0
        %v556 = vadd.f32 %v444, %v555
        %v557 = vpop.f32.mrb[0].mxu0
        %558 = vmatprep.mubr.bf16.mxu0 0
        %559 = vmatmul.mubr.bf16.gmra.mrb[0].mxu0 %v420
        %v560 = vpop.f32.mrb[0].mxu0
        %v561 = vadd.f32 %v444, %v560
        %v562 = vpop.f32.mrb[0].mxu0
        %v563 = vpop.f32.mrb[0].mxu0
        %v564 = vadd.f32 %v444, %v563
        %v565 = vpop.f32.mrb[0].mxu0
        %566 = vmatprep.mubr.bf16.mxu0 0
        %567 = vmatmul.mubr.bf16.gmra.mrb[0].mxu0 %v421
        %v568 = vpop.f32.mrb[0].mxu0
        %v569 = vadd.f32 %v444, %v568
        %v570 = vpop.f32.mrb[0].mxu0
        %v571 = vpop.f32.mrb[0].mxu0
        %v572 = vadd.f32 %v444, %v571
        %v573 = vpop.f32.mrb[0].mxu0
        %574 = vmatprep.mubr.bf16.mxu0 0
        %575 = vmatmul.mubr.bf16.gmra.mrb[0].mxu0 %v422
        %v576 = vpop.f32.mrb[0].mxu0
        %v577 = vadd.f32 %v444, %v576
        %v578 = vpop.f32.mrb[0].mxu0
        %v579 = vpop.f32.mrb[0].mxu0
        %v580 = vadd.f32 %v444, %v579
        %v581 = vpop.f32.mrb[0].mxu0
        %582 = vdwg.mxu0
        %v583 = vxor.u32 %v529, 2147483648
        %v584 = vxor.u32 %v532, 2147483648
        %v585 = vxor.u32 %v537, 2147483648
        %v586 = vxor.u32 %v540, 2147483648
        %v587 = vxor.u32 %v545, 2147483648
        %v588 = vxor.u32 %v548, 2147483648
        %v589 = vxor.u32 %v553, 2147483648
        %v590 = vxor.u32 %v556, 2147483648
        %v591 = vxor.u32 %v561, 2147483648
        %v592 = vxor.u32 %v564, 2147483648
        %v593 = vxor.u32 %v569, 2147483648
        %v594 = vxor.u32 %v572, 2147483648
        %v595 = vxor.u32 %v577, 2147483648
        %v596 = vxor.u32 %v580, 2147483648
        %v597 = vmul.f32 %v583, 1.442695
        %v598 = vpow.pop %v597
        %v599 = vmul.f32 %v584, 1.442695
        %v600 = vpow.pop %v599
        %v601 = vmul.f32 %v585, 1.442695
        %v602 = vpow.pop %v601
        %v603 = vmul.f32 %v586, 1.442695
        %v604 = vpow.pop %v603
        %v605 = vmul.f32 %v587, 1.442695
        %v606 = vpow.pop %v605
        %v607 = vmul.f32 %v588, 1.442695
        %v608 = vpow.pop %v607
        %v609 = vmul.f32 %v589, 1.442695
        %v610 = vpow.pop %v609
        %v611 = vmul.f32 %v590, 1.442695
        %v612 = vpow.pop %v611
        %v613 = vmul.f32 %v591, 1.442695
        %v614 = vpow.pop %v613
        %v615 = vmul.f32 %v592, 1.442695
        %v616 = vpow.pop %v615
        %v617 = vmul.f32 %v593, 1.442695
        %v618 = vpow.pop %v617
        %v619 = vmul.f32 %v594, 1.442695
        %v620 = vpow.pop %v619
        %v621 = vmul.f32 %v595, 1.442695
        %v622 = vpow.pop %v621
        %v623 = vmul.f32 %v596, 1.442695
        %v624 = vpow.pop %v623
        %v625 = vadd.f32 %v598, 1.0
        %v626 = vadd.f32 %v600, 1.0
        %v627 = vadd.f32 %v602, 1.0
        %v628 = vadd.f32 %v604, 1.0
        %v629 = vadd.f32 %v606, 1.0
        %v630 = vadd.f32 %v608, 1.0
        %v631 = vadd.f32 %v610, 1.0
        %v632 = vadd.f32 %v612, 1.0
        %v633 = vadd.f32 %v614, 1.0
        %v634 = vadd.f32 %v616, 1.0
        %v635 = vadd.f32 %v618, 1.0
        %v636 = vadd.f32 %v620, 1.0
        %v637 = vadd.f32 %v622, 1.0
        %v638 = vadd.f32 %v624, 1.0
        %v639 = vrcp.pop %v625
        %v640 = vmul.f32 1.0, %v639
        %v641 = vrcp.pop %v626
        %v642 = vmul.f32 1.0, %v641
        %v643 = vrcp.pop %v627
        %v644 = vmul.f32 1.0, %v643
        %v645 = vrcp.pop %v628
        %v646 = vmul.f32 1.0, %v645
        %v647 = vrcp.pop %v629
        %v648 = vmul.f32 1.0, %v647
        %v649 = vrcp.pop %v630
        %v650 = vmul.f32 1.0, %v649
        %v651 = vrcp.pop %v631
        %v652 = vmul.f32 1.0, %v651
        %v653 = vrcp.pop %v632
        %v654 = vmul.f32 1.0, %v653
        %v655 = vrcp.pop %v633
        %v656 = vmul.f32 1.0, %v655
        %v657 = vrcp.pop %v634
        %v658 = vmul.f32 1.0, %v657
        %v659 = vrcp.pop %v635
        %v660 = vmul.f32 1.0, %v659
        %v661 = vrcp.pop %v636
        %v662 = vmul.f32 1.0, %v661
        %v663 = vrcp.pop %v637
        %v664 = vmul.f32 1.0, %v663
        %v665 = vrcp.pop %v638
        %v666 = vmul.f32 1.0, %v665
        %vm667 = vcmask 130048
        %668 = vst.msk [vmem:[%s226] sm:$0xff] %vm667, %v640
        %669 = vst.msk [vmem:[%s226 + $0x8] sm:$0xff] %vm667, %v642
        %670 = vst.msk [vmem:[%s226 + $0x10] sm:$0xff] %vm667, %v644
        %671 = vst.msk [vmem:[%s226 + $0x18] sm:$0xff] %vm667, %v646
        %672 = vst.msk [vmem:[%s226 + $0x20] sm:$0xff] %vm667, %v648
        %673 = vst.msk [vmem:[%s226 + $0x28] sm:$0xff] %vm667, %v650
        %674 = vst.msk [vmem:[%s226 + $0x30] sm:$0xff] %vm667, %v652
        %675 = vst.msk [vmem:[%s226 + $0x38] sm:$0xff] %vm667, %v654
        %676 = vst.msk [vmem:[%s226 + $0x40] sm:$0xff] %vm667, %v656
        %677 = vst.msk [vmem:[%s226 + $0x48] sm:$0xff] %vm667, %v658
        %678 = vst.msk [vmem:[%s226 + $0x50] sm:$0xff] %vm667, %v660
        %679 = vst.msk [vmem:[%s226 + $0x58] sm:$0xff] %vm667, %v662
        %680 = vst.msk [vmem:[%s226 + $0x60] sm:$0xff] %vm667, %v664
        %681 = vst.msk [vmem:[%s226 + $0x68] sm:$0xff] %vm667, %v666
        %s682 = sand.u32 %s134, 1
        %s683 = sand.u32 %s134, 1
        %s684 = smul.addr %s683, 112
        %s685 = scalar_lea.vmem [#allocation2], %s684
        // Predicated region
        $region41: #{tpu_custom_call.1} parent=39 // pred_check
          %p686 = pneg %p144
        $region42: #{tpu_custom_call.1} parent=39 // pred_check_branch
          %688 = sbr.rel (%p686) target = $region44
        $region43: #{tpu_custom_call.1} parent=39 // pred_region
          %s689 = smul.u32 14, %s16
          %s690 = ssub.s32 25, %s689
          %p691 = scmp.lt.s32.totalorder %s690, 14
          %s692 = scalar_select %p691, %s690, 14
          %s693 = smul.u32 128, %s692
          %p694 = scmp.ne.s32.totalorder 0, %s693
          %s695 = smul.addr %s689, 8
          %s696 = scalar_lea.vmem %s5, %s695
          // Predicated region
          $region45: #{tpu_custom_call.1} parent=43 // pred_check
            %p697 = pneg %p694
          $region46: #{tpu_custom_call.1} parent=43 // pred_check_branch
            %699 = sbr.rel (%p697) target = $region48
          $region47: #{tpu_custom_call.1} parent=43 // pred_region
            // Predicated region
            $region49: #{tpu_custom_call.1} parent=47 // pred_check
              _
            $region50: #{tpu_custom_call.1} parent=47 // pred_check_branch
              %701 = sbr.rel (0) target = $region52
            $region51: #{tpu_custom_call.1} parent=47 // pred_region
              // Predicated region
              $region71: #{tpu_custom_call.1} parent=51 // pred_check
                _
              $region72: #{tpu_custom_call.1} parent=51 // pred_check_branch
                %777 = sbr.rel (0) target = $region74
              $region73: #{tpu_custom_call.1} parent=51 // pred_region
                %s778 = sdiv.u32.pop %s692, 14
                %s779 = srem.u32.pop %s692, 14
                // While loop
                $region75: #{tpu_custom_call.1} parent=73 // loop_pre_header
                  _
                $region76: #{tpu_custom_call.1} parent=73 // loop_header
                  %s781 = sphi 0, %s783
                  %p782 = scmp.ge.s32.totalorder %s781, %s778
                  %s786 = sphi 0, %s819
                  %s787 = sphi %s685, %s822
                  %s788 = sphi %s696, %s823
                $region77: #{tpu_custom_call.1} parent=73 // loop_header_branch
                  %785 = sbr.rel (%p782) target = $region81
                $region78: #{tpu_custom_call.1} parent=73 // loop_body
                  %v789 = vld [vmem:[%s787] sm:$0xff]
                  %790 = vst [vmem:[%s788] sm:$0xff] %v789
                  %v791 = vld [vmem:[%s787 + $0x8] sm:$0xff]
                  %792 = vst [vmem:[%s788 + $0x8] sm:$0xff] %v791
                  %v793 = vld [vmem:[%s787 + $0x10] sm:$0xff]
                  %794 = vst [vmem:[%s788 + $0x10] sm:$0xff] %v793
                  %v795 = vld [vmem:[%s787 + $0x18] sm:$0xff]
                  %796 = vst [vmem:[%s788 + $0x18] sm:$0xff] %v795
                  %v797 = vld [vmem:[%s787 + $0x20] sm:$0xff]
                  %798 = vst [vmem:[%s788 + $0x20] sm:$0xff] %v797
                  %v799 = vld [vmem:[%s787 + $0x28] sm:$0xff]
                  %800 = vst [vmem:[%s788 + $0x28] sm:$0xff] %v799
                  %v801 = vld [vmem:[%s787 + $0x30] sm:$0xff]
                  %802 = vst [vmem:[%s788 + $0x30] sm:$0xff] %v801
                  %v803 = vld [vmem:[%s787 + $0x38] sm:$0xff]
                  %804 = vst [vmem:[%s788 + $0x38] sm:$0xff] %v803
                  %v805 = vld [vmem:[%s787 + $0x40] sm:$0xff]
                  %806 = vst [vmem:[%s788 + $0x40] sm:$0xff] %v805
                  %v807 = vld [vmem:[%s787 + $0x48] sm:$0xff]
                  %808 = vst [vmem:[%s788 + $0x48] sm:$0xff] %v807
                  %v809 = vld [vmem:[%s787 + $0x50] sm:$0xff]
                  %810 = vst [vmem:[%s788 + $0x50] sm:$0xff] %v809
                  %v811 = vld [vmem:[%s787 + $0x58] sm:$0xff]
                  %812 = vst [vmem:[%s788 + $0x58] sm:$0xff] %v811
                  %v813 = vld [vmem:[%s787 + $0x60] sm:$0xff]
                  %814 = vst [vmem:[%s788 + $0x60] sm:$0xff] %v813
                  %v815 = vld [vmem:[%s787 + $0x68] sm:$0xff]
                  %816 = vst [vmem:[%s788 + $0x68] sm:$0xff] %v815
                  %s817 = sadd.s32 1, %s786
                  %p818 = scmp.ge.s32.totalorder %s817, %s778
                  %s819 = scalar_select %p818, 0, %s817
                  %s820 = smul.u32 %s819, 112
                  %s821 = smul.u32 %s819, 112
                  %s822 = scalar_lea.vmem %s685, %s820 [#allocation2]
                  %s823 = scalar_lea.vmem %s696, %s821
                $region79: #{tpu_custom_call.1} parent=73 // loop_footer
                  %s783 = sadd.s32 %s781, 1
                $region80: #{tpu_custom_call.1} parent=73 // loop_footer_branch
                  %780 = sbr.rel target = $region76
                $region81: #{tpu_custom_call.1} parent=73 // loop_exit
                  _
                %s824 = sdiv.u32.pop %s692, 14
                %s825 = srem.u32.pop %s692, 14
                %s826 = smul.u32 %s824, 14
                %s827 = smul.u32 8, %s826
                %s828 = scalar_lea.vmem %s685, %s827 [#allocation2]
                %s829 = smul.u32 8, %s826
                %s830 = scalar_lea.vmem %s696, %s829
                // While loop
                $region82: #{tpu_custom_call.1} parent=73 // loop_pre_header
                  _
                $region83: #{tpu_custom_call.1} parent=73 // loop_header
                  %s832 = sphi 0, %s834
                  %p833 = scmp.ge.s32.totalorder %s832, %s825
                  %s837 = sphi 0, %s844
                  %s838 = sphi %s828, %s847
                  %s839 = sphi %s830, %s848
                $region84: #{tpu_custom_call.1} parent=73 // loop_header_branch
                  %836 = sbr.rel (%p833) target = $region88
                $region85: #{tpu_custom_call.1} parent=73 // loop_body
                  %v840 = vld [vmem:[%s838] sm:$0xff]
                  %841 = vst [vmem:[%s839] sm:$0xff] %v840
                  %s842 = sadd.s32 1, %s837
                  %p843 = scmp.ge.s32.totalorder %s842, %s825
                  %s844 = scalar_select %p843, 0, %s842
                  %s845 = smul.u32 %s844, 8
                  %s846 = smul.u32 %s844, 8
                  %s847 = scalar_lea.vmem %s828, %s845 [#allocation2]
                  %s848 = scalar_lea.vmem %s830, %s846
                $region86: #{tpu_custom_call.1} parent=73 // loop_footer
                  %s834 = sadd.s32 %s832, 1
                $region87: #{tpu_custom_call.1} parent=73 // loop_footer_branch
                  %831 = sbr.rel target = $region83
                $region88: #{tpu_custom_call.1} parent=73 // loop_exit
                  _
              $region74: #{tpu_custom_call.1} parent=51 // pred_fallthru
                _
              // Predicated region
              $region89: #{tpu_custom_call.1} parent=51 // pred_check
                _
              $region90: #{tpu_custom_call.1} parent=51 // pred_check_branch
                %850 = sbr.rel target = $region92
              $region91: #{tpu_custom_call.1} parent=51 // pred_region
                _
              $region92: #{tpu_custom_call.1} parent=51 // pred_fallthru
                _
            $region52: #{tpu_custom_call.1} parent=47 // pred_fallthru
              _
            // Predicated region
            $region53: #{tpu_custom_call.1} parent=47 // pred_check
              _
            $region54: #{tpu_custom_call.1} parent=47 // pred_check_branch
              %703 = sbr.rel target = $region56
            $region55: #{tpu_custom_call.1} parent=47 // pred_region
              %s705 = sdiv.u32.pop %s692, 14
              %s706 = srem.u32.pop %s692, 14
              // While loop
              $region57: #{tpu_custom_call.1} parent=55 // loop_pre_header
                _
              $region58: #{tpu_custom_call.1} parent=55 // loop_header
                %s708 = sphi 0, %s710
                %p709 = scmp.ge.s32.totalorder %s708, %s705
                %s713 = sphi 0, %s746
                %s714 = sphi %s685, %s749
                %s715 = sphi %s696, %s750
              $region59: #{tpu_custom_call.1} parent=55 // loop_header_branch
                %712 = sbr.rel (%p709) target = $region63
              $region60: #{tpu_custom_call.1} parent=55 // loop_body
                %v716 = vld [vmem:[%s714] sm:$0xff]
                %717 = vst [vmem:[%s715] sm:$0xff] %v716
                %v718 = vld [vmem:[%s714 + $0x8] sm:$0xff]
                %719 = vst [vmem:[%s715 + $0x8] sm:$0xff] %v718
                %v720 = vld [vmem:[%s714 + $0x10] sm:$0xff]
                %721 = vst [vmem:[%s715 + $0x10] sm:$0xff] %v720
                %v722 = vld [vmem:[%s714 + $0x18] sm:$0xff]
                %723 = vst [vmem:[%s715 + $0x18] sm:$0xff] %v722
                %v724 = vld [vmem:[%s714 + $0x20] sm:$0xff]
                %725 = vst [vmem:[%s715 + $0x20] sm:$0xff] %v724
                %v726 = vld [vmem:[%s714 + $0x28] sm:$0xff]
                %727 = vst [vmem:[%s715 + $0x28] sm:$0xff] %v726
                %v728 = vld [vmem:[%s714 + $0x30] sm:$0xff]
                %729 = vst [vmem:[%s715 + $0x30] sm:$0xff] %v728
                %v730 = vld [vmem:[%s714 + $0x38] sm:$0xff]
                %731 = vst [vmem:[%s715 + $0x38] sm:$0xff] %v730
                %v732 = vld [vmem:[%s714 + $0x40] sm:$0xff]
                %733 = vst [vmem:[%s715 + $0x40] sm:$0xff] %v732
                %v734 = vld [vmem:[%s714 + $0x48] sm:$0xff]
                %735 = vst [vmem:[%s715 + $0x48] sm:$0xff] %v734
                %v736 = vld [vmem:[%s714 + $0x50] sm:$0xff]
                %737 = vst [vmem:[%s715 + $0x50] sm:$0xff] %v736
                %v738 = vld [vmem:[%s714 + $0x58] sm:$0xff]
                %739 = vst [vmem:[%s715 + $0x58] sm:$0xff] %v738
                %v740 = vld [vmem:[%s714 + $0x60] sm:$0xff]
                %741 = vst [vmem:[%s715 + $0x60] sm:$0xff] %v740
                %v742 = vld [vmem:[%s714 + $0x68] sm:$0xff]
                %743 = vst [vmem:[%s715 + $0x68] sm:$0xff] %v742
                %s744 = sadd.s32 1, %s713
                %p745 = scmp.ge.s32.totalorder %s744, %s705
                %s746 = scalar_select %p745, 0, %s744
                %s747 = smul.u32 %s746, 112
                %s748 = smul.u32 %s746, 112
                %s749 = scalar_lea.vmem %s685, %s747 [#allocation2]
                %s750 = scalar_lea.vmem %s696, %s748
              $region61: #{tpu_custom_call.1} parent=55 // loop_footer
                %s710 = sadd.s32 %s708, 1
              $region62: #{tpu_custom_call.1} parent=55 // loop_footer_branch
                %707 = sbr.rel target = $region58
              $region63: #{tpu_custom_call.1} parent=55 // loop_exit
                _
              %s751 = sdiv.u32.pop %s692, 14
              %s752 = srem.u32.pop %s692, 14
              %s753 = smul.u32 %s751, 14
              %s754 = smul.u32 8, %s753
              %s755 = scalar_lea.vmem %s685, %s754 [#allocation2]
              %s756 = smul.u32 8, %s753
              %s757 = scalar_lea.vmem %s696, %s756
              // While loop
              $region64: #{tpu_custom_call.1} parent=55 // loop_pre_header
                _
              $region65: #{tpu_custom_call.1} parent=55 // loop_header
                %s759 = sphi 0, %s761
                %p760 = scmp.ge.s32.totalorder %s759, %s752
                %s764 = sphi 0, %s771
                %s765 = sphi %s755, %s774
                %s766 = sphi %s757, %s775
              $region66: #{tpu_custom_call.1} parent=55 // loop_header_branch
                %763 = sbr.rel (%p760) target = $region70
              $region67: #{tpu_custom_call.1} parent=55 // loop_body
                %v767 = vld [vmem:[%s765] sm:$0xff]
                %768 = vst [vmem:[%s766] sm:$0xff] %v767
                %s769 = sadd.s32 1, %s764
                %p770 = scmp.ge.s32.totalorder %s769, %s752
                %s771 = scalar_select %p770, 0, %s769
                %s772 = smul.u32 %s771, 8
                %s773 = smul.u32 %s771, 8
                %s774 = scalar_lea.vmem %s755, %s772 [#allocation2]
                %s775 = scalar_lea.vmem %s757, %s773
              $region68: #{tpu_custom_call.1} parent=55 // loop_footer
                %s761 = sadd.s32 %s759, 1
              $region69: #{tpu_custom_call.1} parent=55 // loop_footer_branch
                %758 = sbr.rel target = $region65
              $region70: #{tpu_custom_call.1} parent=55 // loop_exit
                _
            $region56: #{tpu_custom_call.1} parent=47 // pred_fallthru
              _
          $region48: #{tpu_custom_call.1} parent=43 // pred_fallthru
            _
          %851 = vnop
        $region44: #{tpu_custom_call.1} parent=39 // pred_fallthru
          _
      $region40: #{tpu_custom_call.1} parent=5 // pred_fallthru
        _
      %p852 = scmp.le.s32.totalorder 2, %s11
      // Predicated region
      $region93: #{tpu_custom_call.1} parent=5 // pred_check
        %p853 = pneg %p852
      $region94: #{tpu_custom_call.1} parent=5 // pred_check_branch
        %855 = sbr.rel (%p853) target = $region96
      $region95: #{tpu_custom_call.1} parent=5 // pred_region
        %s856 = ssub.s32 %s11, 2
        // Predicated region
        $region97: #{tpu_custom_call.1} parent=95 // pred_check
          %p857 = pneg %p150
        $region98: #{tpu_custom_call.1} parent=95 // pred_check_branch
          %859 = sbr.rel (%p857) target = $region100
        $region99: #{tpu_custom_call.1} parent=95 // pred_region
          %s860 = sand.u32 %s135, 1
          %s861 = sand.u32 %s135, 1
          %s862 = smul.addr %s861, 112
          %s863 = scalar_lea.vmem [#allocation2], %s862
        $region100: #{tpu_custom_call.1} parent=95 // pred_fallthru
          _
      $region96: #{tpu_custom_call.1} parent=5 // pred_fallthru
        _
    $region6: #{tpu_custom_call.1} parent=1 // loop_footer
      %s15 = sadd.s32 1, %s11
    $region7: #{tpu_custom_call.1} parent=1 // loop_footer_branch
      %10 = sbr.rel target = $region3
    $region8: #{tpu_custom_call.1} parent=1 // loop_exit
      _

</llo_original>
